<compile_context>
chip_gen: v5e
topology: v5e:2x2
jax: 0.10.0
libtpu: 0.0.40
codegen_flags: <defaults>
</compile_context>

<pallas_src>
import functools

import jax
import jax.numpy as jnp
from jax.experimental import pallas as pl
from jax.experimental.pallas import tpu as pltpu


def _round_up(x, m):
    return ((x + m - 1) // m) * m


def _choose_tm(M, Kp, Ep, *, budget_bytes=16 * 1024 * 1024, tm_cap=1024):
    """Largest sublane-aligned row tile whose double-buffered working set
    (patches in + output out) plus the resident weight/vectors fits the
    budget."""
    per_row = 2 * (Kp * 2) + 2 * (Ep * 4)          # 2x-buffered bf16 in + f32 out
    fixed = 2 * (Kp * Ep * 2 + 3 * Ep * 4)         # weight + bias/gamma/beta
    avail = max(budget_bytes - fixed, 8 * per_row)
    tm = min(tm_cap, avail // per_row)
    tm = max(8, (tm // 8) * 8)                     # sublane aligned
    tm = min(tm, _round_up(M, 8))                  # never larger than the data
    return tm


def patch_embed_kernel(p_ref, w_ref, b_ref, g_ref, beta_ref, o_ref, *, e_true):
    # p_ref:   (tm, Kp)  bf16 patches tile (K zero-padded)
    # w_ref:   (Kp, Ep)  bf16 projection weight (zero-padded rows/cols)
    # b_ref:   (1, Ep)   f32 conv bias       (zero-padded)
    # g_ref:   (1, Ep)   f32 LayerNorm gamma (zero-padded)
    # beta_ref:(1, Ep)   f32 LayerNorm beta  (zero-padded)
    # o_ref:   (tm, Ep)  f32 output tile (lane-dense; padded cols sliced later)
    y = jnp.dot(p_ref[...], w_ref[...], preferred_element_type=jnp.float32)
    y = y + b_ref[...]  # padded cols of W and bias are zero -> y == 0 there

    # LayerNorm over the true embed dim E (biased variance, eps = 1e-5).
    # Padded lanes contribute exactly 0 to both sums, so dividing by e_true
    # gives the correct statistics.  sum and sum-of-squares are independent
    # cross-lane reductions (both can issue to the XLU back-to-back).
    inv_e = 1.0 / float(e_true)
    s = jnp.sum(y, axis=-1, keepdims=True)
    ss = jnp.sum(y * y, axis=-1, keepdims=True)
    mean = s * inv_e
    var = jnp.maximum(ss * inv_e - mean * mean, 0.0)
    inv = jax.lax.rsqrt(var + 1e-5)
    o_ref[...] = ((y - mean) * inv * g_ref[...] + beta_ref[...]).astype(o_ref.dtype)


def patch_embed_forward(x, w_conv, b_conv, gamma, beta, patch_size):
    """x: (B, C, H, W) float32 NCHW (like the PyTorch module).
    w_conv: (E, C, p, p), b_conv/gamma/beta: (E,).
    Returns (out (B, N, E) float32, (Hp, Wp))."""
    B, C, H, W = x.shape
    p = patch_size
    assert H % p == 0 and W % p == 0, "img_size must be divisible by patch_size"
    Hp, Wp = H // p, W // p
    N = Hp * Wp
    E = w_conv.shape[0]
    K = C * p * p
    M = B * N

    # Lane / sublane-aligned padded sizes and row tile.
    Kp = _round_up(K, 128)
    Ep = _round_up(E, 128)
    tm = _choose_tm(M, Kp, Ep)
    Mp = _round_up(M, tm)

    # --- glue: patchify (stride==kernel Conv2d as a matmul), pad, cast bf16 ---
    # (B, C, Hp, p, Wp, p) -> (B, Hp, Wp, C, p, p) -> (M, K)
    patches = x.reshape(B, C, Hp, p, Wp, p).transpose(0, 2, 4, 1, 3, 5).reshape(M, K)
    patches = jnp.pad(patches, ((0, Mp - M), (0, Kp - K))).astype(jnp.bfloat16)

    # Conv2d weight (E, C, p, p) -> (K, E), zero-pad, bf16.
    w_mat = jnp.pad(w_conv.reshape(E, K).T, ((0, Kp - K), (0, Ep - E))).astype(jnp.bfloat16)
    b_row = jnp.pad(b_conv.astype(jnp.float32), (0, Ep - E)).reshape(1, Ep)
    g_row = jnp.pad(gamma.astype(jnp.float32), (0, Ep - E)).reshape(1, Ep)
    beta_row = jnp.pad(beta.astype(jnp.float32), (0, Ep - E)).reshape(1, Ep)

    grid = (Mp // tm,)

    cost = pl.CostEstimate(
        flops=2 * Mp * Kp * Ep,
        transcendentals=Mp,  # one rsqrt per row
        bytes_accessed=Mp * Kp * 2 + Kp * Ep * 2 + Mp * Ep * 4 + 3 * Ep * 4,
    )

    out = pl.pallas_call(
        functools.partial(patch_embed_kernel, e_true=E),
        out_shape=jax.ShapeDtypeStruct((Mp, Ep), jnp.float32),
        grid_spec=pltpu.PrefetchScalarGridSpec(
            num_scalar_prefetch=0,
            grid=grid,
            in_specs=[
                pl.BlockSpec((tm, Kp), lambda i: (i, 0)),
                pl.BlockSpec((Kp, Ep), lambda i: (0, 0)),
                pl.BlockSpec((1, Ep), lambda i: (0, 0)),
                pl.BlockSpec((1, Ep), lambda i: (0, 0)),
                pl.BlockSpec((1, Ep), lambda i: (0, 0)),
            ],
            out_specs=pl.BlockSpec((tm, Ep), lambda i: (i, 0)),
        ),
        compiler_params=pltpu.CompilerParams(
            dimension_semantics=("parallel",),
            allow_input_fusion=[True, False, False, False, False],
        ),
        cost_estimate=cost,
    )(patches, w_mat, b_row, g_row, beta_row)

    out = out[:M, :E].reshape(B, N, E)
    return out, (Hp, Wp)


def reference_forward(x, w_conv, b_conv, gamma, beta, patch_size):
    """Pure-JAX f32 reference (conv via lax.conv_general_dilated)."""
    p = patch_size
    y = jax.lax.conv_general_dilated(
        x, w_conv, window_strides=(p, p), padding="VALID",
        dimension_numbers=("NCHW", "OIHW", "NCHW"))
    y = y + b_conv.reshape(1, -1, 1, 1)
    B_, E, Hp, Wp = y.shape
    y = y.reshape(B_, E, Hp * Wp).transpose(0, 2, 1)  # (B, N, E)
    mean = jnp.mean(y, axis=-1, keepdims=True)
    var = jnp.mean((y - mean) ** 2, axis=-1, keepdims=True)
    y = (y - mean) * jax.lax.rsqrt(var + 1e-5) * gamma + beta
    return y, (Hp, Wp)


if __name__ == "__main__":
    key = jax.random.PRNGKey(0)
    k_x, k_w, k_b, k_g, k_be = jax.random.split(key, 5)

    # Small shapes consistent with the module: img_size=16, patch_size=4,
    # in_chans=4, embed_dim=32, batch=2.
    B, C, H, W = 2, 4, 16, 16
    patch_size = 4
    E = 32

    x = jax.random.normal(k_x, (B, C, H, W), dtype=jnp.float32)
    w_conv = jax.random.normal(k_w, (E, C, patch_size, patch_size),
                               dtype=jnp.float32) * 0.05
    b_conv = jax.random.normal(k_b, (E,), dtype=jnp.float32) * 0.05
    gamma = 1.0 + 0.1 * jax.random.normal(k_g, (E,), dtype=jnp.float32)
    beta = 0.1 * jax.random.normal(k_be, (E,), dtype=jnp.float32)

    out, (Hp, Wp) = patch_embed_forward(x, w_conv, b_conv, gamma, beta, patch_size)
    out = jax.block_until_ready(out)

    ref, (Hr, Wr) = reference_forward(x, w_conv, b_conv, gamma, beta, patch_size)
    assert out.shape == (B, (H // patch_size) * (W // patch_size), E)
    assert (Hp, Wp) == (Hr, Wr) == (H // patch_size, W // patch_size)
    # bf16 matmul inputs (f32 accumulate) vs pure-f32 reference: loose-ish tol.
    assert jnp.allclose(out, ref, atol=3e-2, rtol=3e-2), float(
        jnp.max(jnp.abs(out - ref)))

    print("KERNEL_OK")
</pallas_src>

<mosaic_0001>
module attributes {stable_mosaic.version = 11 : i64} {
  func.func @patch_embed_kernel(%arg0: i32, %arg1: memref<32x128xbf16, #tpu.memory_space<vmem>>, %arg2: memref<128x128xbf16, #tpu.memory_space<vmem>>, %arg3: memref<1x128xf32, #tpu.memory_space<vmem>>, %arg4: memref<1x128xf32, #tpu.memory_space<vmem>>, %arg5: memref<1x128xf32, #tpu.memory_space<vmem>>, %arg6: memref<32x128xf32, #tpu.memory_space<vmem>>) attributes {dimension_semantics = [#tpu.dimension_semantics<parallel>], iteration_bounds = array<i64: 1>, scalar_prefetch = 0 : i64, scratch_operands = 0 : i64, tpu.core_type = #tpu.core_type<tc>, window_params = [{transform_indices = @transform_0, window_bounds = array<i64: 32, 128>}, {pipeline_mode = #tpu.pipeline_mode<synchronous>, transform_indices = @transform_1, window_bounds = array<i64: 128, 128>}, {pipeline_mode = #tpu.pipeline_mode<synchronous>, transform_indices = @transform_2, window_bounds = array<i64: 1, 128>}, {pipeline_mode = #tpu.pipeline_mode<synchronous>, transform_indices = @transform_3, window_bounds = array<i64: 1, 128>}, {pipeline_mode = #tpu.pipeline_mode<synchronous>, transform_indices = @transform_4, window_bounds = array<i64: 1, 128>}, {transform_indices = @transform_5, window_bounds = array<i64: 32, 128>}]} {
    %c0 = arith.constant 0 : index
    %c0_0 = arith.constant 0 : index
    %0 = vector.load %arg1[%c0, %c0_0] : memref<32x128xbf16, #tpu.memory_space<vmem>>, vector<32x128xbf16>
    %c0_1 = arith.constant 0 : index
    %c0_2 = arith.constant 0 : index
    %1 = vector.load %arg2[%c0_1, %c0_2] : memref<128x128xbf16, #tpu.memory_space<vmem>>, vector<128x128xbf16>
    %cst = arith.constant dense<0.000000e+00> : vector<32x128xf32>
    %2 = tpu.matmul %0, %1, %cst {dimension_numbers = #tpu.dot_dimension_numbers<[1], [0], [0], [1], [0, 0, 1, 1], [], []>} : vector<32x128xbf16>, vector<128x128xbf16>, vector<32x128xf32> -> vector<32x128xf32>
    %c0_3 = arith.constant 0 : index
    %c0_4 = arith.constant 0 : index
    %3 = vector.load %arg3[%c0_3, %c0_4] : memref<1x128xf32, #tpu.memory_space<vmem>>, vector<1x128xf32>
    %4 = vector.broadcast %3 : vector<1x128xf32> to vector<32x128xf32>
    %5 = arith.addf %2, %4 : vector<32x128xf32>
    %cst_5 = arith.constant dense<0.000000e+00> : vector<32xf32>
    %6 = vector.multi_reduction <add>, %5, %cst_5 [1] : vector<32x128xf32> to vector<32xf32>
    %7 = vector.shape_cast %6 : vector<32xf32> to vector<32x1xf32>
    %8 = arith.mulf %5, %5 : vector<32x128xf32>
    %cst_6 = arith.constant dense<0.000000e+00> : vector<32xf32>
    %9 = vector.multi_reduction <add>, %8, %cst_6 [1] : vector<32x128xf32> to vector<32xf32>
    %10 = vector.shape_cast %9 : vector<32xf32> to vector<32x1xf32>
    %cst_7 = arith.constant 3.125000e-02 : f32
    %11 = vector.broadcast %cst_7 : f32 to vector<32x1xf32>
    %12 = arith.mulf %7, %11 : vector<32x1xf32>
    %cst_8 = arith.constant 3.125000e-02 : f32
    %13 = vector.broadcast %cst_8 : f32 to vector<32x1xf32>
    %14 = arith.mulf %10, %13 : vector<32x1xf32>
    %15 = arith.mulf %12, %12 : vector<32x1xf32>
    %16 = arith.subf %14, %15 : vector<32x1xf32>
    %cst_9 = arith.constant 0.000000e+00 : f32
    %17 = vector.broadcast %cst_9 : f32 to vector<32x1xf32>
    %18 = arith.maximumf %16, %17 : vector<32x1xf32>
    %cst_10 = arith.constant 9.99999974E-6 : f32
    %19 = vector.broadcast %cst_10 : f32 to vector<32x1xf32>
    %20 = arith.addf %18, %19 : vector<32x1xf32>
    %21 = math.rsqrt %20 : vector<32x1xf32>
    %22 = vector.broadcast %12 : vector<32x1xf32> to vector<32x128xf32>
    %23 = arith.subf %5, %22 : vector<32x128xf32>
    %24 = vector.broadcast %21 : vector<32x1xf32> to vector<32x128xf32>
    %25 = arith.mulf %23, %24 : vector<32x128xf32>
    %c0_11 = arith.constant 0 : index
    %c0_12 = arith.constant 0 : index
    %26 = vector.load %arg4[%c0_11, %c0_12] : memref<1x128xf32, #tpu.memory_space<vmem>>, vector<1x128xf32>
    %27 = vector.broadcast %26 : vector<1x128xf32> to vector<32x128xf32>
    %28 = arith.mulf %25, %27 : vector<32x128xf32>
    %c0_13 = arith.constant 0 : index
    %c0_14 = arith.constant 0 : index
    %29 = vector.load %arg5[%c0_13, %c0_14] : memref<1x128xf32, #tpu.memory_space<vmem>>, vector<1x128xf32>
    %30 = vector.broadcast %29 : vector<1x128xf32> to vector<32x128xf32>
    %31 = arith.addf %28, %30 : vector<32x128xf32>
    %c0_15 = arith.constant 0 : index
    %c0_16 = arith.constant 0 : index
    %32 = vector.load %arg6[%c0_15, %c0_16] : memref<32x128xf32, #tpu.memory_space<vmem>>, vector<32x128xf32>
    tpu.vector_store %arg6[%c0_15, %c0_16], %31 {strides = array<i32>} : memref<32x128xf32, #tpu.memory_space<vmem>>, vector<32x128xf32>,
    return
  }
  func.func @transform_0(%arg0: i32) -> (i32, i32) {
    %c0_i32 = arith.constant 0 : i32
    %c0_i32_0 = arith.constant 0 : i32
    return %arg0, %c0_i32 : i32, i32
  }
  func.func @transform_1(%arg0: i32) -> (i32, i32) {
    %c0_i32 = arith.constant 0 : i32
    %c0_i32_0 = arith.constant 0 : i32
    %c0_i32_1 = arith.constant 0 : i32
    return %c0_i32, %c0_i32_0 : i32, i32
  }
  func.func @transform_2(%arg0: i32) -> (i32, i32) {
    %c0_i32 = arith.constant 0 : i32
    %c0_i32_0 = arith.constant 0 : i32
    %c0_i32_1 = arith.constant 0 : i32
    return %c0_i32, %c0_i32_0 : i32, i32
  }
  func.func @transform_3(%arg0: i32) -> (i32, i32) {
    %c0_i32 = arith.constant 0 : i32
    %c0_i32_0 = arith.constant 0 : i32
    %c0_i32_1 = arith.constant 0 : i32
    return %c0_i32, %c0_i32_0 : i32, i32
  }
  func.func @transform_4(%arg0: i32) -> (i32, i32) {
    %c0_i32 = arith.constant 0 : i32
    %c0_i32_0 = arith.constant 0 : i32
    %c0_i32_1 = arith.constant 0 : i32
    return %c0_i32, %c0_i32_0 : i32, i32
  }
  func.func @transform_5(%arg0: i32) -> (i32, i32) {
    %c0_i32 = arith.constant 0 : i32
    %c0_i32_0 = arith.constant 0 : i32
    return %arg0, %c0_i32 : i32, i32
  }
}

</mosaic_0001>

<llo_original>
// kernel: tpu_custom_call.1
$region0: #{tpu_custom_call.1}
  #allocation0 [shape = 'u32[]', space=smem, size = 0x4, offset = 0x4, fixed_abs, tag = 'smem constant byte address 0x4 - core index']
  #allocation1 [shape = 'u32[72,128]{1,0:T(1,128)}', space=vmem, size = 0x9000, scoped, tag = 'internal scratch']
  %s0 = inlined_call_operand.hbm [shape: bf16[32,128], index: 0, kind: input, shape index: {}]
  %s1 = inlined_call_operand.hbm [shape: bf16[128,128], index: 1, kind: input, shape index: {}]
  %s2 = inlined_call_operand.vmem [shape: f32[1,128], index: 2, kind: input, shape index: {}]
  %s3 = inlined_call_operand.vmem [shape: f32[1,128], index: 3, kind: input, shape index: {}]
  %s4 = inlined_call_operand.vmem [shape: f32[1,128], index: 4, kind: input, shape index: {}]
  %s5 = inlined_call_operand.hbm [shape: f32[32,128], index: 5, kind: output, shape index: {}]
  %s6 = sld [smem:[#allocation0]]
  $region38: #{tpu_custom_call.1} parent=0
    _
  %s8 = ssub.s32 1, %s6
  %s9 = scalar_select 0, %s8, %s6
  $region1: #{tpu_custom_call.1} parent=0
    #allocation2 [shape = 'u8[8192]{0}', space=vmem, size = 0x2000, scoped, tag = 'input window, operand 0, single buffered']
    #allocation3 [shape = 's32[1]{0}', space=sflag, size = 0x4, scoped, tag = 'scoped memory for tpu_custom_call.1']
    #allocation4 [shape = 's32[1]{0}', space=sflag, size = 0x4, scoped, tag = 'scoped memory for tpu_custom_call.1']
    #allocation5 [shape = 'u8[32768]{0}', space=vmem, size = 0x8000, scoped, tag = 'input window, operand 1, single buffered']
    #allocation6 [shape = 's32[1]{0}', space=sflag, size = 0x4, scoped, tag = 'scoped memory for tpu_custom_call.1']
    #allocation7 [shape = 'u8[16384]{0}', space=vmem, size = 0x4000, scoped, tag = 'output window, operand 0, single buffered']
    %10 = vsyncpa [#allocation3], 0
    %11 = vsyncpa [#allocation6], 0
    %12 = vsyncpa [#allocation4], 0
    // Predicated region
    $region2: #{tpu_custom_call.1} parent=1 // pred_check
      _
    $region3: #{tpu_custom_call.1} parent=1 // pred_check_branch
      %14 = sbr.rel (0) target = $region5
    $region4: #{tpu_custom_call.1} parent=1 // pred_region
      %16 = vsyncadd [#allocation3], 0
      %s17 = sshll.u32 %s0, 4
      %s18 = int_to_ptr.hbm [resolvable:$true] %s17
      %s19 = sshll.u32 [#allocation2], 4
      %s20 = int_to_ptr.vmem [resolvable:$true] %s19
      %25 = dma.hbm_to_vmem [thread:$0]  %s18, 256, %s20, [#allocation3], 64, 64, 4
    $region5: #{tpu_custom_call.1} parent=1 // pred_fallthru
      _
    // Predicated region
    $region6: #{tpu_custom_call.1} parent=1 // pred_check
      _
    $region7: #{tpu_custom_call.1} parent=1 // pred_check_branch
      %27 = sbr.rel (0) target = $region9
    $region8: #{tpu_custom_call.1} parent=1 // pred_region
      %29 = vsyncadd [#allocation6], 0
      %s30 = sshll.u32 %s1, 4
      %s31 = int_to_ptr.hbm [resolvable:$true] %s30
      %s32 = sshll.u32 [#allocation5], 4
      %s33 = int_to_ptr.vmem [resolvable:$true] %s32
      %38 = dma.hbm_to_vmem [thread:$0]  %s31, 1024, %s33, [#allocation6], 64, 64, 4
    $region9: #{tpu_custom_call.1} parent=1 // pred_fallthru
      _
    // Predicated region
    $region10: #{tpu_custom_call.1} parent=1 // pred_check
      _
    $region11: #{tpu_custom_call.1} parent=1 // pred_check_branch
      %40 = sbr.rel (0) target = $region13
    $region12: #{tpu_custom_call.1} parent=1 // pred_region
      _
    $region13: #{tpu_custom_call.1} parent=1 // pred_fallthru
      _
    // Predicated region
    $region14: #{tpu_custom_call.1} parent=1 // pred_check
      _
    $region15: #{tpu_custom_call.1} parent=1 // pred_check_branch
      %42 = sbr.rel (0) target = $region17
    $region16: #{tpu_custom_call.1} parent=1 // pred_region
      _
    $region17: #{tpu_custom_call.1} parent=1 // pred_fallthru
      _
    // Predicated region
    $region18: #{tpu_custom_call.1} parent=1 // pred_check
      _
    $region19: #{tpu_custom_call.1} parent=1 // pred_check_branch
      %44 = sbr.rel (0) target = $region21
    $region20: #{tpu_custom_call.1} parent=1 // pred_region
      _
    $region21: #{tpu_custom_call.1} parent=1 // pred_fallthru
      _
    // Predicated region
    $region22: #{tpu_custom_call.1} parent=1 // pred_check
      _
    $region23: #{tpu_custom_call.1} parent=1 // pred_check_branch
      %46 = sbr.rel (0) target = $region25
    $region24: #{tpu_custom_call.1} parent=1 // pred_region
      %48 = dma.done [#allocation3], 256
    $region25: #{tpu_custom_call.1} parent=1 // pred_fallthru
      _
    // Predicated region
    $region26: #{tpu_custom_call.1} parent=1 // pred_check
      _
    $region27: #{tpu_custom_call.1} parent=1 // pred_check_branch
      %50 = sbr.rel (0) target = $region29
    $region28: #{tpu_custom_call.1} parent=1 // pred_region
      %52 = dma.done [#allocation6], 1024
    $region29: #{tpu_custom_call.1} parent=1 // pred_fallthru
      _
    %v53 = vld [vmem:[#allocation2] sm:$0xf]
    %v54 = vld [vmem:[#allocation2 + $0x4] sm:$0xf]
    %v55 = vld [vmem:[#allocation2 + $0x8] sm:$0xf]
    %v56 = vld [vmem:[#allocation2 + $0xc] sm:$0xf]
    %v57 = vld [vmem:[#allocation5] sm:$0xf]
    %v58 = vld [vmem:[#allocation5 + $0x4] sm:$0xf]
    %v59 = vld [vmem:[#allocation5 + $0x8] sm:$0xf]
    %v60 = vld [vmem:[#allocation5 + $0xc] sm:$0xf]
    %v61 = vld [vmem:[#allocation5 + $0x10] sm:$0xf]
    %v62 = vld [vmem:[#allocation5 + $0x14] sm:$0xf]
    %v63 = vld [vmem:[#allocation5 + $0x18] sm:$0xf]
    %v64 = vld [vmem:[#allocation5 + $0x1c] sm:$0xf]
    %v65 = vld [vmem:[#allocation5 + $0x20] sm:$0xf]
    %v66 = vld [vmem:[#allocation5 + $0x24] sm:$0xf]
    %v67 = vld [vmem:[#allocation5 + $0x28] sm:$0xf]
    %v68 = vld [vmem:[#allocation5 + $0x2c] sm:$0xf]
    %v69 = vld [vmem:[#allocation5 + $0x30] sm:$0xf]
    %v70 = vld [vmem:[#allocation5 + $0x34] sm:$0xf]
    %v71 = vld [vmem:[#allocation5 + $0x38] sm:$0xf]
    %v72 = vld [vmem:[#allocation5 + $0x3c] sm:$0xf]
    %v73 = vld [vmem:[%s2] sm:$0x1]
    %v75 = vperm.slane %v73, 0
    %v81 = vunpack.c.l.b16 %v53
    %v82 = vunpack.c.l.b16 %v54
    %v83 = vunpack.c.l.b16 %v55
    %v84 = vunpack.c.l.b16 %v56
    %v85 = vpack.c.b16 %v82, %v81
    %v86 = vpack.c.b16 %v84, %v83
    %v105 = vunpack.c.l.b16 %v57
    %v106 = vunpack.c.l.b16 %v58
    %v107 = vunpack.c.l.b16 %v59
    %v108 = vunpack.c.l.b16 %v60
    %v109 = vunpack.c.l.b16 %v61
    %v110 = vunpack.c.l.b16 %v62
    %v111 = vunpack.c.l.b16 %v63
    %v112 = vunpack.c.l.b16 %v64
    %v113 = vunpack.c.l.b16 %v65
    %v114 = vunpack.c.l.b16 %v66
    %v115 = vunpack.c.l.b16 %v67
    %v116 = vunpack.c.l.b16 %v68
    %v117 = vunpack.c.l.b16 %v69
    %v118 = vunpack.c.l.b16 %v70
    %v119 = vunpack.c.l.b16 %v71
    %v120 = vunpack.c.l.b16 %v72
    %v121 = vpack.c.b16 %v106, %v105
    %v122 = vpack.c.b16 %v108, %v107
    %v123 = vpack.c.b16 %v110, %v109
    %v124 = vpack.c.b16 %v112, %v111
    %v125 = vpack.c.b16 %v114, %v113
    %v126 = vpack.c.b16 %v116, %v115
    %v127 = vpack.c.b16 %v118, %v117
    %v128 = vpack.c.b16 %v120, %v119
    %137 = vmatpush.bf16.msra.mxu0 %v128
    %138 = vmatpush.bf16.msra.mxu0 %v127
    %139 = vmatpush.bf16.msra.mxu0 %v126
    %140 = vmatpush.bf16.msra.mxu0 %v125
    %141 = vmatpush.bf16.msra.mxu0 %v124
    %142 = vmatpush.bf16.msra.mxu0 %v123
    %143 = vmatpush.bf16.msra.mxu0 %v122
    %144 = vmatpush.bf16.msra.mxu0 %v121
    %145 = vmatmul.bf16.gmra.mxu0 %v85
    %v146 = vpop.f32.mrf.mxu0
    %v147 = vadd.f32 %v75, %v146
    %v148 = vpop.f32.mrf.mxu0
    %v149 = vadd.f32 %v75, %v148
    %150 = vmatmul.bf16.gmra.mxu0 %v86
    %v151 = vpop.f32.mrf.mxu0
    %v152 = vadd.f32 %v75, %v151
    %v153 = vpop.f32.mrf.mxu0
    %v154 = vadd.f32 %v75, %v153
    %155 = vdwg.mxu0
    %156 = vadd.xlane.f32.xlu0 %v147
    %v157 = vpop.xlane.xlu0 %156
    %158 = vadd.xlane.f32.xlu0 %v149
    %v159 = vpop.xlane.xlu0 %158
    %160 = vadd.xlane.f32.xlu0 %v152
    %v161 = vpop.xlane.xlu0 %160
    %162 = vadd.xlane.f32.xlu0 %v154
    %v163 = vpop.xlane.xlu0 %162
    %v164 = vmul.f32 %v147, %v147
    %v165 = vmul.f32 %v149, %v149
    %v166 = vmul.f32 %v152, %v152
    %v167 = vmul.f32 %v154, %v154
    %168 = vadd.xlane.f32.xlu0 %v164
    %v169 = vpop.xlane.xlu0 %168
    %170 = vadd.xlane.f32.xlu0 %v165
    %v171 = vpop.xlane.xlu0 %170
    %172 = vadd.xlane.f32.xlu0 %v166
    %v173 = vpop.xlane.xlu0 %172
    %174 = vadd.xlane.f32.xlu0 %v167
    %v175 = vpop.xlane.xlu0 %174
    %v176 = vmul.f32 %v157, 0.03125
    %v177 = vmul.f32 %v159, 0.03125
    %v178 = vmul.f32 %v161, 0.03125
    %v179 = vmul.f32 %v163, 0.03125
    %v180 = vmul.f32 %v169, 0.03125
    %v181 = vmul.f32 %v171, 0.03125
    %v182 = vmul.f32 %v173, 0.03125
    %v183 = vmul.f32 %v175, 0.03125
    %v184 = vmul.f32 %v176, %v176
    %v185 = vmul.f32 %v177, %v177
    %v186 = vmul.f32 %v178, %v178
    %v187 = vmul.f32 %v179, %v179
    %v188 = vsub.f32 %v180, %v184
    %v189 = vsub.f32 %v181, %v185
    %v190 = vsub.f32 %v182, %v186
    %v191 = vsub.f32 %v183, %v187
    %v192 = vmax.f32 %v188, 0.0
    %v193 = vmax.f32 %v189, 0.0
    %v194 = vmax.f32 %v190, 0.0
    %v195 = vmax.f32 %v191, 0.0
    %v196 = vadd.f32 %v192, 1e-05
    %v197 = vadd.f32 %v193, 1e-05
    %v198 = vadd.f32 %v194, 1e-05
    %v199 = vadd.f32 %v195, 1e-05
    %v200 = vrsqrt.pop %v196
    %v201 = vmul.f32 %v200, %v196
    %v202 = vmul.f32 %v201, %v200
    %v203 = vmul.f32 0.5, %v202
    %v204 = vsub.f32 1.5, %v203
    %v205 = vmul.f32 %v200, %v204
    %vm206 = vweird.f32 %v196
    %vm207 = vweird.f32 %v200
    %vm208 = vmor %vm206, %vm207
    %v209 = vsel %vm208, %v200, %v205
    %v210 = vrsqrt.pop %v197
    %v211 = vmul.f32 %v210, %v197
    %v212 = vmul.f32 %v211, %v210
    %v213 = vmul.f32 0.5, %v212
    %v214 = vsub.f32 1.5, %v213
    %v215 = vmul.f32 %v210, %v214
    %vm216 = vweird.f32 %v197
    %vm217 = vweird.f32 %v210
    %vm218 = vmor %vm216, %vm217
    %v219 = vsel %vm218, %v210, %v215
    %v220 = vrsqrt.pop %v198
    %v221 = vmul.f32 %v220, %v198
    %v222 = vmul.f32 %v221, %v220
    %v223 = vmul.f32 0.5, %v222
    %v224 = vsub.f32 1.5, %v223
    %v225 = vmul.f32 %v220, %v224
    %vm226 = vweird.f32 %v198
    %vm227 = vweird.f32 %v220
    %vm228 = vmor %vm226, %vm227
    %v229 = vsel %vm228, %v220, %v225
    %v230 = vrsqrt.pop %v199
    %v231 = vmul.f32 %v230, %v199
    %v232 = vmul.f32 %v231, %v230
    %v233 = vmul.f32 0.5, %v232
    %v234 = vsub.f32 1.5, %v233
    %v235 = vmul.f32 %v230, %v234
    %vm236 = vweird.f32 %v199
    %vm237 = vweird.f32 %v230
    %vm238 = vmor %vm236, %vm237
    %v239 = vsel %vm238, %v230, %v235
    %v240 = vsub.f32 %v147, %v176
    %v241 = vsub.f32 %v149, %v177
    %v242 = vsub.f32 %v152, %v178
    %v243 = vsub.f32 %v154, %v179
    %v244 = vmul.f32 %v240, %v209
    %v245 = vmul.f32 %v241, %v219
    %v246 = vmul.f32 %v242, %v229
    %v247 = vmul.f32 %v243, %v239
    %v248 = vld [vmem:[%s3] sm:$0x1]
    %v250 = vperm.slane %v248, 0
    %v252 = vmul.f32 %v244, %v250
    %v253 = vmul.f32 %v245, %v250
    %v254 = vmul.f32 %v246, %v250
    %v255 = vmul.f32 %v247, %v250
    %v256 = vld [vmem:[%s4] sm:$0x1]
    %v258 = vperm.slane %v256, 0
    %v260 = vadd.f32 %v252, %v258
    %v261 = vadd.f32 %v253, %v258
    %v262 = vadd.f32 %v254, %v258
    %v263 = vadd.f32 %v255, %v258
    %264 = vst [vmem:[#allocation7] sm:$0xff] %v260
    %265 = vst [vmem:[#allocation7 + $0x8] sm:$0xff] %v261
    %266 = vst [vmem:[#allocation7 + $0x10] sm:$0xff] %v262
    %267 = vst [vmem:[#allocation7 + $0x18] sm:$0xff] %v263
    // Predicated region
    $region30: #{tpu_custom_call.1} parent=1 // pred_check
      _
    $region31: #{tpu_custom_call.1} parent=1 // pred_check_branch
      %269 = sbr.rel (0) target = $region33
    $region32: #{tpu_custom_call.1} parent=1 // pred_region
      %271 = vsyncadd [#allocation4], 0
      %s272 = sshll.u32 [#allocation7], 4
      %s273 = int_to_ptr.vmem [resolvable:$true] %s272
      %s274 = sshll.u32 %s5, 4
      %s275 = int_to_ptr.hbm [resolvable:$true] %s274
      %280 = dma.vmem_to_hbm [thread:$0]  %s273, 512, %s275, [#allocation4], 128, 128, 8
    $region33: #{tpu_custom_call.1} parent=1 // pred_fallthru
      _
    // Predicated region
    $region34: #{tpu_custom_call.1} parent=1 // pred_check
      _
    $region35: #{tpu_custom_call.1} parent=1 // pred_check_branch
      %282 = sbr.rel (0) target = $region37
    $region36: #{tpu_custom_call.1} parent=1 // pred_region
      %284 = dma.done [#allocation4], 512
    $region37: #{tpu_custom_call.1} parent=1 // pred_fallthru
      _
    %285 = vsyncpa [#allocation3], 1
    %286 = vsyncpa [#allocation6], 1
    %287 = vsyncpa [#allocation4], 1

</llo_original>
